<compile_context>
chip_gen: v7x
topology: tpu7x:2x2x1
jax: 0.10.0
libtpu: 0.0.40
codegen_flags: <defaults>
</compile_context>

<pallas_src>
import functools

import jax
import jax.numpy as jnp
from jax import lax
from jax.experimental import pallas as pl
from jax.experimental.pallas import tpu as pltpu


def _round_up(x, m):
    return ((x + m - 1) // m) * m


def _cdiv(a, b):
    return (a + b - 1) // b


def _conv_geom(H, W):
    """Geometry of the flattened, halo'd output grid and guarded input."""
    Wp = W + 2                       # padded row width (SAME halo columns)
    Sout = (H + 2) * Wp              # flattened (H+2, W+2) output grid
    if Sout <= 2048:
        TS = _round_up(Sout, 128)    # one lane-dense chunk
        SOUT_PAD = TS
    else:
        TS = 1024
        SOUT_PAD = _round_up(Sout, TS)
    GL = 2 * Wp                                   # top guard: 2 full rows
    guard_elems = (SOUT_PAD - Sout) + (W + 3)     # right-hand read overhang
    pad_top = 1 + 2                               # SAME halo row + guard rows
    pad_bot = 1 + _cdiv(guard_elems, Wp)          # SAME halo row + guard rows
    L = (H + pad_top + pad_bot) * Wp              # flattened guarded length
    return dict(Wp=Wp, Sout=Sout, TS=TS, SOUT_PAD=SOUT_PAD, GL=GL,
                pad_top=pad_top, pad_bot=pad_bot, L=L)


def _make_conv3x3_relu(B, Cin, Cout, *, Wp, L, GL, TS, SOUT_PAD):
    """pallas_call for 3x3 SAME conv + (folded) bias + ReLU, lane-dense."""
    KPAD = _round_up(9 * Cin + 1, 8)     # 9 taps * Cin rows + 1 bias ones-row
    NPAD = _round_up(Cout, 8)            # output channels on sublanes
    # NOTE: with real channel counts on v6e/v7x, round KPAD/NPAD up to 256 to
    # fill the 256x256 MXU; for Cin=Cout=4 the MXU is never the binding unit.

    def kernel(x_ref, w_ref, o_ref, p_ref):
        # Constant rows of the transposed patch matrix, rewritten every grid
        # step (VMEM scratch is never zero-initialised and may be shared
        # across megacore shards): row 9*Cin is the all-ones bias row, the
        # rows above are the zero K-tail.  Only these KPAD-9*Cin rows are
        # initialised -- no full-scratch memset (review item).
        n_const = KPAD - 9 * Cin
        const_rows = jnp.where(
            lax.broadcasted_iota(jnp.int32, (n_const, TS), 0) == 0, 1.0, 0.0)
        p_ref[9 * Cin:KPAD, :] = const_rows.astype(p_ref.dtype)

        # Static in-kernel loop over lane chunks of the flattened output grid
        # (one chunk for small images; offsets stay fully static).
        # TODO(synk): for large images make this a grid axis (halo-window DMA)
        # so each TensorCore sees >=4-8 pipeline steps; with B=2 and 16x16 the
        # whole problem is one step per batch element.
        for cs in range(0, SOUT_PAD, TS):
            # Transposed im2col: K (= 9 taps x Cin) on sublanes, spatial on
            # lanes.  Every tap is a full-lane-width bf16 ref load + store
            # into scratch -- no masked 4-of-128 lane stores, no per-tap
            # casts, no image copy into a halo scratch (the guarded, padded
            # image is the pipelined input block itself).
            for dy in range(3):
                for dx in range(3):
                    k0 = (dy * 3 + dx) * Cin
                    off = GL + cs + (dy - 1) * Wp + (dx - 1)
                    p_ref[k0:k0 + Cin, :] = x_ref[0, :, off:off + TS]
            # One MXU pass per chunk: (NPAD, KPAD) x (KPAD, TS) bf16 operands,
            # f32 accumulation.  Bias arrives through the ones row, so the
            # epilogue is just ReLU (lane-dense f32 store).
            acc = jnp.dot(w_ref[...], p_ref[...],
                          preferred_element_type=jnp.float32)
            o_ref[0, :, cs:cs + TS] = jnp.maximum(acc, 0.0).astype(o_ref.dtype)

    flops = 2 * B * NPAD * KPAD * SOUT_PAD
    bytes_accessed = (B * Cin * L * 2          # bf16 padded activations in
                      + NPAD * KPAD * 2        # bf16 weights (resident)
                      + B * NPAD * SOUT_PAD * 4)  # compact f32 output

    conv = pl.pallas_call(
        kernel,
        out_shape=jax.ShapeDtypeStruct((B, NPAD, SOUT_PAD), jnp.float32),
        grid_spec=pltpu.PrefetchScalarGridSpec(
            num_scalar_prefetch=0,
            grid=(B,),
            in_specs=[
                # Guarded, halo'd, flattened bf16 image of one batch element
                # (~4 KB): tiny even on v7x's 64 MiB VMEM, so it stays a
                # plain pipelined block -- no duplicate VMEM copy.
                pl.BlockSpec((1, Cin, L), lambda b: (b, 0, 0)),
                # Resident im2col weights with folded bias.
                pl.BlockSpec((NPAD, KPAD), lambda b: (0, 0)),
            ],
            out_specs=pl.BlockSpec((1, NPAD, SOUT_PAD), lambda b: (b, 0, 0)),
            scratch_shapes=[pltpu.VMEM((KPAD, TS), jnp.bfloat16)],
        ),
        compiler_params=pltpu.CompilerParams(
            dimension_semantics=("parallel",),
        ),
        cost_estimate=pl.CostEstimate(
            flops=flops, transcendentals=0, bytes_accessed=bytes_accessed),
    )
    return conv, NPAD


class StochasticBlock:
    """JAX port of the PyTorch StochasticBlock wrapper (block = Conv3x3 + ReLU)."""

    def __init__(self, weight_oihw, bias, survival_prob=0.8):
        cout, cin, kh, kw = weight_oihw.shape
        assert (kh, kw) == (3, 3)
        self.cin, self.cout = int(cin), int(cout)
        self.survival_prob = survival_prob
        kpad = _round_up(9 * self.cin + 1, 8)
        npad = _round_up(self.cout, 8)
        # (Cout, Cin, 3, 3) -> transposed im2col weight matrix (NPAD, KPAD),
        # row-order [co], column-order [(dy*3+dx)*Cin + ci], with the bias
        # folded into column 9*Cin (it multiplies the patch ones-row); padded
        # and cast once to bf16 for the MXU.
        w_rows = jnp.transpose(weight_oihw, (0, 2, 3, 1)).reshape(
            self.cout, 9 * self.cin)
        w_mat = jnp.zeros((npad, kpad), jnp.float32)
        w_mat = w_mat.at[:self.cout, :9 * self.cin].set(w_rows)
        w_mat = w_mat.at[:self.cout, 9 * self.cin].set(bias)
        self.w_mat = w_mat.astype(jnp.bfloat16)

    def _block(self, x_nchw):
        B, C, H, W = x_nchw.shape
        g = _conv_geom(H, W)
        conv, npad = _make_conv3x3_relu(
            B, self.cin, self.cout, Wp=g["Wp"], L=g["L"], GL=g["GL"],
            TS=g["TS"], SOUT_PAD=g["SOUT_PAD"])
        # One tiny pad (SAME halo + flat guard rows) fused with the single
        # bf16 cast; NCHW flattening to (C, spatial) is the lane-dense layout
        # already, so there are no NHWC transposes anywhere.
        xp = jnp.pad(x_nchw, ((0, 0), (0, 0),
                              (g["pad_top"], g["pad_bot"]), (1, 1)))
        xflat = xp.astype(jnp.bfloat16).reshape(B, C, g["L"])
        y = conv(xflat, self.w_mat)                       # (B, NPAD, SOUT_PAD)
        y = y[:, :self.cout, :g["Sout"]].reshape(B, self.cout, H + 2, W + 2)
        y = y[:, :, 1:H + 1, 1:W + 1]                     # drop halo outputs
        return y.astype(x_nchw.dtype)

    @functools.partial(jax.jit, static_argnums=(0, 3))
    def __call__(self, x_nchw, key, training=False):
        if not training:
            return self._block(x_nchw)
        # Training: skip the block with prob (1 - survival_prob); return x.
        # (No 1/p rescale -- matches the quoted PyTorch module exactly.)
        u = jax.random.uniform(key, ())
        keep = u <= self.survival_prob
        return lax.cond(keep, self._block, lambda x: x, x_nchw)


if __name__ == "__main__":
    key = jax.random.PRNGKey(0)
    k_x, k_w, k_b, k_gate = jax.random.split(key, 4)

    B, C, H, W = 2, 4, 16, 16
    x = jax.random.normal(k_x, (B, C, H, W), dtype=jnp.float32)

    # Deterministic Conv2d(C, C, 3, padding=1) parameters.
    fan_in = C * 3 * 3
    w = jax.random.normal(k_w, (C, C, 3, 3), dtype=jnp.float32) * (2.0 / fan_in) ** 0.5
    b = jax.random.normal(k_b, (C,), dtype=jnp.float32) * 0.01

    mod = StochasticBlock(w, b, survival_prob=0.8)

    # Eval mode (deterministic): always runs the block.
    y_eval = jax.block_until_ready(mod(x, k_gate, False))
    # Training mode: coin flip against survival_prob.
    y_train = jax.block_until_ready(mod(x, k_gate, True))

    # Reference: f32 conv on bf16-rounded operands + bf16-rounded bias (the
    # kernel feeds the MXU bf16 activations/weights and folds the bias in bf16,
    # accumulating in f32).
    x_bf = x.astype(jnp.bfloat16).astype(jnp.float32)
    w_bf = w.astype(jnp.bfloat16).astype(jnp.float32)
    b_bf = b.astype(jnp.bfloat16).astype(jnp.float32)
    ref = lax.conv_general_dilated(
        x_bf, w_bf, window_strides=(1, 1), padding="SAME",
        dimension_numbers=("NCHW", "OIHW", "NCHW"))
    ref = jnp.maximum(ref + b_bf[None, :, None, None], 0.0)

    assert y_eval.shape == (B, C, H, W)
    assert y_train.shape == (B, C, H, W)
    assert jnp.allclose(y_eval, ref, atol=2e-2, rtol=2e-2), float(
        jnp.max(jnp.abs(y_eval - ref)))
    # Training output is either the block output (kept) or the identity (skipped).
    assert (bool(jnp.allclose(y_train, ref, atol=2e-2, rtol=2e-2))
            or bool(jnp.allclose(y_train, x)))

    print("KERNEL_OK")
</pallas_src>

<mosaic_0001>
module attributes {stable_mosaic.version = 11 : i64} {
  func.func @kernel(%arg0: i32, %arg1: memref<1x4x450xbf16, #tpu.memory_space<vmem>>, %arg2: memref<8x40xbf16, #tpu.memory_space<vmem>>, %arg3: memref<1x8x384xf32, #tpu.memory_space<vmem>>, %arg4: memref<40x384xbf16, #tpu.memory_space<vmem>>) attributes {dimension_semantics = [#tpu.dimension_semantics<parallel>], iteration_bounds = array<i64: 2>, scalar_prefetch = 0 : i64, scratch_operands = 1 : i64, tpu.core_type = #tpu.core_type<tc>, window_params = [{transform_indices = @transform_0, window_bounds = array<i64: 1, 4, 450>}, {pipeline_mode = #tpu.pipeline_mode<synchronous>, transform_indices = @transform_1, window_bounds = array<i64: 8, 40>}, {transform_indices = @transform_2, window_bounds = array<i64: 1, 8, 384>}]} {
    %0 = tpu.iota {dimensions = array<i32: 0>} : vector<4x384xi32>
    %c0_i32 = arith.constant 0 : i32
    %1 = vector.broadcast %c0_i32 : i32 to vector<4x384xi32>
    %2 = arith.cmpi eq, %0, %1 : vector<4x384xi32>
    %cst = arith.constant 1.000000e+00 : f32
    %cst_0 = arith.constant 0.000000e+00 : f32
    %3 = vector.broadcast %cst : f32 to vector<4x384xf32>
    %4 = vector.broadcast %cst_0 : f32 to vector<4x384xf32>
    %5 = arith.select %2, %3, %4 : vector<4x384xi1>, vector<4x384xf32>
    %6 = arith.truncf %5 : vector<4x384xf32> to vector<4x384xbf16>
    %c36 = arith.constant 36 : index
    %c0 = arith.constant 0 : index
    %7 = vector.load %arg4[%c36, %c0] : memref<40x384xbf16, #tpu.memory_space<vmem>>, vector<4x384xbf16>
    tpu.vector_store %arg4[%c36, %c0], %6 {strides = array<i32>} : memref<40x384xbf16, #tpu.memory_space<vmem>>, vector<4x384xbf16>,
    %c0_1 = arith.constant 0 : index
    %c0_2 = arith.constant 0 : index
    %c17 = arith.constant 17 : index
    %8 = vector.load %arg1[%c0_1, %c0_2, %c17] : memref<1x4x450xbf16, #tpu.memory_space<vmem>>, vector<1x4x384xbf16>
    %9 = vector.shape_cast %8 : vector<1x4x384xbf16> to vector<4x384xbf16>
    %c0_3 = arith.constant 0 : index
    %c0_4 = arith.constant 0 : index
    %10 = vector.load %arg4[%c0_3, %c0_4] : memref<40x384xbf16, #tpu.memory_space<vmem>>, vector<4x384xbf16>
    tpu.vector_store %arg4[%c0_3, %c0_4], %9 {strides = array<i32>} : memref<40x384xbf16, #tpu.memory_space<vmem>>, vector<4x384xbf16>,
    %c0_5 = arith.constant 0 : index
    %c0_6 = arith.constant 0 : index
    %c18 = arith.constant 18 : index
    %11 = vector.load %arg1[%c0_5, %c0_6, %c18] : memref<1x4x450xbf16, #tpu.memory_space<vmem>>, vector<1x4x384xbf16>
    %12 = vector.shape_cast %11 : vector<1x4x384xbf16> to vector<4x384xbf16>
    %c4 = arith.constant 4 : index
    %c0_7 = arith.constant 0 : index
    %13 = vector.load %arg4[%c4, %c0_7] : memref<40x384xbf16, #tpu.memory_space<vmem>>, vector<4x384xbf16>
    tpu.vector_store %arg4[%c4, %c0_7], %12 {strides = array<i32>} : memref<40x384xbf16, #tpu.memory_space<vmem>>, vector<4x384xbf16>,
    %c0_8 = arith.constant 0 : index
    %c0_9 = arith.constant 0 : index
    %c19 = arith.constant 19 : index
    %14 = vector.load %arg1[%c0_8, %c0_9, %c19] : memref<1x4x450xbf16, #tpu.memory_space<vmem>>, vector<1x4x384xbf16>
    %15 = vector.shape_cast %14 : vector<1x4x384xbf16> to vector<4x384xbf16>
    %c8 = arith.constant 8 : index
    %c0_10 = arith.constant 0 : index
    %16 = vector.load %arg4[%c8, %c0_10] : memref<40x384xbf16, #tpu.memory_space<vmem>>, vector<4x384xbf16>
    tpu.vector_store %arg4[%c8, %c0_10], %15 {strides = array<i32>} : memref<40x384xbf16, #tpu.memory_space<vmem>>, vector<4x384xbf16>,
    %c0_11 = arith.constant 0 : index
    %c0_12 = arith.constant 0 : index
    %c35 = arith.constant 35 : index
    %17 = vector.load %arg1[%c0_11, %c0_12, %c35] : memref<1x4x450xbf16, #tpu.memory_space<vmem>>, vector<1x4x384xbf16>
    %18 = vector.shape_cast %17 : vector<1x4x384xbf16> to vector<4x384xbf16>
    %c12 = arith.constant 12 : index
    %c0_13 = arith.constant 0 : index
    %19 = vector.load %arg4[%c12, %c0_13] : memref<40x384xbf16, #tpu.memory_space<vmem>>, vector<4x384xbf16>
    tpu.vector_store %arg4[%c12, %c0_13], %18 {strides = array<i32>} : memref<40x384xbf16, #tpu.memory_space<vmem>>, vector<4x384xbf16>,
    %c0_14 = arith.constant 0 : index
    %c0_15 = arith.constant 0 : index
    %c36_16 = arith.constant 36 : index
    %20 = vector.load %arg1[%c0_14, %c0_15, %c36_16] : memref<1x4x450xbf16, #tpu.memory_space<vmem>>, vector<1x4x384xbf16>
    %21 = vector.shape_cast %20 : vector<1x4x384xbf16> to vector<4x384xbf16>
    %c16 = arith.constant 16 : index
    %c0_17 = arith.constant 0 : index
    %22 = vector.load %arg4[%c16, %c0_17] : memref<40x384xbf16, #tpu.memory_space<vmem>>, vector<4x384xbf16>
    tpu.vector_store %arg4[%c16, %c0_17], %21 {strides = array<i32>} : memref<40x384xbf16, #tpu.memory_space<vmem>>, vector<4x384xbf16>,
    %c0_18 = arith.constant 0 : index
    %c0_19 = arith.constant 0 : index
    %c37 = arith.constant 37 : index
    %23 = vector.load %arg1[%c0_18, %c0_19, %c37] : memref<1x4x450xbf16, #tpu.memory_space<vmem>>, vector<1x4x384xbf16>
    %24 = vector.shape_cast %23 : vector<1x4x384xbf16> to vector<4x384xbf16>
    %c20 = arith.constant 20 : index
    %c0_20 = arith.constant 0 : index
    %25 = vector.load %arg4[%c20, %c0_20] : memref<40x384xbf16, #tpu.memory_space<vmem>>, vector<4x384xbf16>
    tpu.vector_store %arg4[%c20, %c0_20], %24 {strides = array<i32>} : memref<40x384xbf16, #tpu.memory_space<vmem>>, vector<4x384xbf16>,
    %c0_21 = arith.constant 0 : index
    %c0_22 = arith.constant 0 : index
    %c53 = arith.constant 53 : index
    %26 = vector.load %arg1[%c0_21, %c0_22, %c53] : memref<1x4x450xbf16, #tpu.memory_space<vmem>>, vector<1x4x384xbf16>
    %27 = vector.shape_cast %26 : vector<1x4x384xbf16> to vector<4x384xbf16>
    %c24 = arith.constant 24 : index
    %c0_23 = arith.constant 0 : index
    %28 = vector.load %arg4[%c24, %c0_23] : memref<40x384xbf16, #tpu.memory_space<vmem>>, vector<4x384xbf16>
    tpu.vector_store %arg4[%c24, %c0_23], %27 {strides = array<i32>} : memref<40x384xbf16, #tpu.memory_space<vmem>>, vector<4x384xbf16>,
    %c0_24 = arith.constant 0 : index
    %c0_25 = arith.constant 0 : index
    %c54 = arith.constant 54 : index
    %29 = vector.load %arg1[%c0_24, %c0_25, %c54] : memref<1x4x450xbf16, #tpu.memory_space<vmem>>, vector<1x4x384xbf16>
    %30 = vector.shape_cast %29 : vector<1x4x384xbf16> to vector<4x384xbf16>
    %c28 = arith.constant 28 : index
    %c0_26 = arith.constant 0 : index
    %31 = vector.load %arg4[%c28, %c0_26] : memref<40x384xbf16, #tpu.memory_space<vmem>>, vector<4x384xbf16>
    tpu.vector_store %arg4[%c28, %c0_26], %30 {strides = array<i32>} : memref<40x384xbf16, #tpu.memory_space<vmem>>, vector<4x384xbf16>,
    %c0_27 = arith.constant 0 : index
    %c0_28 = arith.constant 0 : index
    %c55 = arith.constant 55 : index
    %32 = vector.load %arg1[%c0_27, %c0_28, %c55] : memref<1x4x450xbf16, #tpu.memory_space<vmem>>, vector<1x4x384xbf16>
    %33 = vector.shape_cast %32 : vector<1x4x384xbf16> to vector<4x384xbf16>
    %c32 = arith.constant 32 : index
    %c0_29 = arith.constant 0 : index
    %34 = vector.load %arg4[%c32, %c0_29] : memref<40x384xbf16, #tpu.memory_space<vmem>>, vector<4x384xbf16>
    tpu.vector_store %arg4[%c32, %c0_29], %33 {strides = array<i32>} : memref<40x384xbf16, #tpu.memory_space<vmem>>, vector<4x384xbf16>,
    %c0_30 = arith.constant 0 : index
    %c0_31 = arith.constant 0 : index
    %35 = vector.load %arg2[%c0_30, %c0_31] : memref<8x40xbf16, #tpu.memory_space<vmem>>, vector<8x40xbf16>
    %c0_32 = arith.constant 0 : index
    %c0_33 = arith.constant 0 : index
    %36 = vector.load %arg4[%c0_32, %c0_33] : memref<40x384xbf16, #tpu.memory_space<vmem>>, vector<40x384xbf16>
    %cst_34 = arith.constant dense<0.000000e+00> : vector<8x384xf32>
    %37 = tpu.matmul %35, %36, %cst_34 {dimension_numbers = #tpu.dot_dimension_numbers<[1], [0], [0], [1], [0, 0, 1, 1], [], []>} : vector<8x40xbf16>, vector<40x384xbf16>, vector<8x384xf32> -> vector<8x384xf32>
    %cst_35 = arith.constant 0.000000e+00 : f32
    %38 = vector.broadcast %cst_35 : f32 to vector<8x384xf32>
    %39 = arith.maximumf %37, %38 : vector<8x384xf32>
    %c0_36 = arith.constant 0 : index
    %c0_37 = arith.constant 0 : index
    %c0_38 = arith.constant 0 : index
    %40 = vector.load %arg3[%c0_36, %c0_37, %c0_38] : memref<1x8x384xf32, #tpu.memory_space<vmem>>, vector<1x8x384xf32>
    %41 = vector.shape_cast %40 : vector<1x8x384xf32> to vector<8x384xf32>
    %42 = vector.shape_cast %39 : vector<8x384xf32> to vector<1x8x384xf32>
    tpu.vector_store %arg3[%c0_36, %c0_37, %c0_38], %42 {strides = array<i32>} : memref<1x8x384xf32, #tpu.memory_space<vmem>>, vector<1x8x384xf32>,
    return
  }
  func.func @transform_0(%arg0: i32) -> (i32, i32, i32) {
    %c0_i32 = arith.constant 0 : i32
    %c0_i32_0 = arith.constant 0 : i32
    %c0_i32_1 = arith.constant 0 : i32
    return %arg0, %c0_i32, %c0_i32_0 : i32, i32, i32
  }
  func.func @transform_1(%arg0: i32) -> (i32, i32) {
    %c0_i32 = arith.constant 0 : i32
    %c0_i32_0 = arith.constant 0 : i32
    %c0_i32_1 = arith.constant 0 : i32
    return %c0_i32, %c0_i32_0 : i32, i32
  }
  func.func @transform_2(%arg0: i32) -> (i32, i32, i32) {
    %c0_i32 = arith.constant 0 : i32
    %c0_i32_0 = arith.constant 0 : i32
    %c0_i32_1 = arith.constant 0 : i32
    return %arg0, %c0_i32, %c0_i32_0 : i32, i32, i32
  }
}

</mosaic_0001>

<llo_original>
// kernel: a_call__.1
$region0: #{a_call__.1}
  #allocation0 [shape = 'u32[]', space=smem, size = 0x4, offset = 0x4, fixed_abs, tag = 'smem constant byte address 0x4 - core index']
  #allocation1 [shape = 'u32[144,128]{1,0:T(1,128)}', space=vmem, size = 0x12000, scoped, tag = 'internal scratch']
  #allocation2 [shape = 'bf16[40,384]{1,0:T(8,128)(2,1)}', space=vmem, size = 0x7800, scoped, tag = 'scratch operand']
  %s0 = inlined_call_operand.vmem [shape: bf16[2,4,450], index: 0, kind: input, shape index: {}]
  %s1 = inlined_call_operand.vmem [shape: bf16[8,40], index: 1, kind: input, shape index: {}]
  %s2 = inlined_call_operand.vmem [shape: f32[2,8,384], index: 2, kind: output, shape index: {}]
  %s3 = sld [smem:[#allocation0]]
  $region41: #{a_call__.1} parent=0
    _
  %s5 = ssub.s32 1, %s3
  %s6 = scalar_select 0, %s5, %s3
  loop: start=0, step=1, limit=4
  $region2: #{a_call__.1} parent=0 // loop_pre_header
    _
  $region3: #{a_call__.1} parent=0 // loop_header
    %s8 = sphi 0, %s12
    %p9 = scmp.ge.s32.totalorder %s8, 4
    %s18 = sphi 0, %s20
    %s21 = sphi 0, %s18
    %s22 = sphi 0, %s21
    %s38 = sphi 0, %s22
    %s42 = sphi 0, %s42
    %s44 = sphi 0, %s42
    %s45 = sphi 0, %s44
    %s59 = sphi 0, %s45
    %s65 = sphi 0, %s67
    %s68 = sphi 0, %s65
    %s69 = sphi 0, %s68
    %s85 = sphi 0, %s69
  $region4: #{a_call__.1} parent=0 // loop_header_branch
    %11 = sbr.rel (%p9) target = $region8
  $region5: #{a_call__.1} parent=0 // loop_body
    %s13 = ssub.s32 %s8, 1
    %s14 = ssub.s32 %s8, 2
    %s15 = sadd.s32 %s8, 1
    %s16 = ssub.s32 %s8, %s15
    %p17 = scmp.eq.s32.totalorder %s16, 0
    %s19 = sadd.s32 %s18, 1
    %s20 = scalar_select %p17, %s18, %s19
    %p23 = pneg %p17
    %p24 = scmp.eq.s32.totalorder %s8, 1
    %p25 = por %p23, %p24
    %p26 = scmp.ne.s32.totalorder %s18, %s21
    %p27 = scmp.eq.s32.totalorder %s8, 0
    %p28 = por %p26, %p27
    %p29 = scmp.ne.s32.totalorder %s18, %s21
    %p30 = scmp.eq.s32.totalorder %s13, 1
    %p31 = por %p29, %p30
    %p32 = scmp.ne.s32.totalorder %s21, %s22
    %p33 = scmp.eq.s32.totalorder %s13, 0
    %p34 = por %p32, %p33
    %p35 = scmp.ne.s32.totalorder %s21, %s22
    %p36 = scmp.eq.s32.totalorder %s14, 1
    %p37 = por %p35, %p36
    %p39 = scmp.ne.s32.totalorder %s22, %s38
    %p40 = scmp.eq.s32.totalorder %s14, 0
    %p41 = por %p39, %p40
    %s43 = sadd.s32 %s42, 1
    %p46 = scmp.eq.s32.totalorder %s8, 1
    %p47 = scmp.ne.s32.totalorder %s42, %s44
    %p48 = scmp.eq.s32.totalorder %s8, 0
    %p49 = por %p47, %p48
    %p50 = scmp.ne.s32.totalorder %s42, %s44
    %p51 = scmp.eq.s32.totalorder %s13, 1
    %p52 = por %p50, %p51
    %p53 = scmp.ne.s32.totalorder %s44, %s45
    %p54 = scmp.eq.s32.totalorder %s13, 0
    %p55 = por %p53, %p54
    %p56 = scmp.ne.s32.totalorder %s44, %s45
    %p57 = scmp.eq.s32.totalorder %s14, 1
    %p58 = por %p56, %p57
    %p60 = scmp.ne.s32.totalorder %s45, %s59
    %p61 = scmp.eq.s32.totalorder %s14, 0
    %p62 = por %p60, %p61
    %s63 = ssub.s32 %s8, %s15
    %p64 = scmp.eq.s32.totalorder %s63, 0
    %s66 = sadd.s32 %s65, 1
    %s67 = scalar_select %p64, %s65, %s66
    %p70 = pneg %p64
    %p71 = scmp.eq.s32.totalorder %s8, 1
    %p72 = por %p70, %p71
    %p73 = scmp.ne.s32.totalorder %s65, %s68
    %p74 = scmp.eq.s32.totalorder %s8, 0
    %p75 = por %p73, %p74
    %p76 = scmp.ne.s32.totalorder %s65, %s68
    %p77 = scmp.eq.s32.totalorder %s13, 1
    %p78 = por %p76, %p77
    %p79 = scmp.ne.s32.totalorder %s68, %s69
    %p80 = scmp.eq.s32.totalorder %s13, 0
    %p81 = por %p79, %p80
    %p82 = scmp.ne.s32.totalorder %s68, %s69
    %p83 = scmp.eq.s32.totalorder %s14, 1
    %p84 = por %p82, %p83
    %p86 = scmp.ne.s32.totalorder %s69, %s85
    %p87 = scmp.eq.s32.totalorder %s14, 0
    %p88 = por %p86, %p87
    %p89 = scmp.le.s32.totalorder 1, %s8
    %p90 = scmp.lt.s32.totalorder %s8, 3
    %p91 = pnand %p89, %p90
    %p92 = pneg %p91
    // Predicated region
    $region9: #{a_call__.1} parent=5 // pred_check
      _
    $region10: #{a_call__.1} parent=5 // pred_check_branch
      %94 = sbr.rel (%p91) target = $region12
    $region11: #{a_call__.1} parent=5 // pred_region
      %s95 = ssub.s32 %s8, 1
      // Predicated region
      $region13: #{a_call__.1} parent=11 // pred_check
        %p96 = pneg %p55
      $region14: #{a_call__.1} parent=11 // pred_check_branch
        %98 = sbr.rel (%p96) target = $region16
      $region15: #{a_call__.1} parent=11 // pred_region
        _
      $region16: #{a_call__.1} parent=11 // pred_fallthru
        _
    $region12: #{a_call__.1} parent=5 // pred_fallthru
      _
    %p99 = scmp.lt.s32.totalorder %s8, 2
    // Predicated region
    $region17: #{a_call__.1} parent=5 // pred_check
      %p100 = pneg %p99
    $region18: #{a_call__.1} parent=5 // pred_check_branch
      %102 = sbr.rel (%p100) target = $region20
    $region19: #{a_call__.1} parent=5 // pred_region
      // Predicated region
      $region21: #{a_call__.1} parent=19 // pred_check
        %p103 = pneg %p28
      $region22: #{a_call__.1} parent=19 // pred_check_branch
        %105 = sbr.rel (%p103) target = $region24
      $region23: #{a_call__.1} parent=19 // pred_region
        %p106 = scmp.lt.s32.totalorder %s8, 1
        %s107 = scalar_select %p106, %s8, 1
        %s108 = smul.addr %s107, 4
        %s109 = smul.addr %s108, 2
        %s110 = scalar_lea.vmem %s0, %s109
      $region24: #{a_call__.1} parent=19 // pred_fallthru
        _
    $region20: #{a_call__.1} parent=5 // pred_fallthru
      _
    %p111 = scmp.le.s32.totalorder 1, %s8
    %p112 = scmp.lt.s32.totalorder %s8, 3
    %p113 = pnand %p111, %p112
    %p114 = pneg %p113
    // Predicated region
    $region25: #{a_call__.1} parent=5 // pred_check
      _
    $region26: #{a_call__.1} parent=5 // pred_check_branch
      %116 = sbr.rel (%p113) target = $region28
    $region27: #{a_call__.1} parent=5 // pred_region
      %s117 = ssub.s32 %s8, 1
      %p118 = scmp.lt.s32.totalorder %s13, 1
      %s119 = scalar_select %p118, %s13, 1
      %s120 = smul.addr %s119, 4
      %s121 = smul.addr %s120, 2
      %s122 = scalar_lea.vmem %s0, %s121
      %p123 = pneg %p34
      %p124 = pneg %p31
      %p125 = pneg %p55
      %p126 = pneg %p52
      %p127 = pneg %p81
      %p128 = pneg %p78
      %p129 = scmp.lt.s32.totalorder %s13, 1
      %s130 = scalar_select %p129, %s13, 1
      %s131 = smul.addr %s130, 3
      %s132 = smul.addr %s131, 8
      %s133 = scalar_lea.vmem %s2, %s132
      %p134 = scmp.lt.s32.totalorder %s13, 1
      %s135 = scalar_select %p134, %s13, 1
      %s136 = smul.addr %s135, 4
      %s137 = smul.addr %s136, 2
      %s138 = scalar_lea.vmem %s0, %s137
      %p139 = scmp.lt.s32.totalorder %s13, 1
      %s140 = scalar_select %p139, %s13, 1
      %s141 = smul.addr %s140, 3
      %s142 = smul.addr %s141, 8
      %s143 = scalar_lea.vmem %s2, %s142
      %v145 = vlaneseq
      %v146 = vshrl.u32 %v145, 7
      %vm147 = vcmp.eq.s32.totalorder %v146, 0
      %v148 = vsel %vm147, 1.0, 0.0
      %v149 = vpack.c.bf16 %v148, %v148
      %v152 = vunpack.c.l.s4 839922192
      %v153 = vunpack.c.0.s8 %v152
      %v154 = vlaneseq
      %v155 = vshrl.u32 %v154, 7
      %v156 = vsub.s32 %v153, %v155
      %v157 = vrot.slane %v149, %v156
      %v158 = vrot.slane %v157, 6
      %160 = vst [vmem:[#allocation2 + $0x30] sm:$0xcc] %v158
      %161 = vst [vmem:[#allocation2 + $0x38] sm:$0xc] %v158
      %v162 = vld [vmem:[%s138] sm:$0xff]
      %v164 = vcombine.high %v162, %v162
      %v166 = vunpack.c.l.s4 1983009808
      %v167 = vunpack.c.0.s8 %v166
      %v168 = vlaneseq
      %v169 = vshrl.u32 %v168, 7
      %v170 = vsub.s32 %v167, %v169
      %v171 = vrot.slane %v162, %v170
      %v173 = vunpack.c.l.s4 1983009808
      %v174 = vunpack.c.0.s8 %v173
      %v175 = vlaneseq
      %v176 = vshrl.u32 %v175, 7
      %v177 = vsub.s32 %v174, %v176
      %v178 = vrot.slane %v164, %v177
      %179 = vrot.lane.b32.xlu0 %v171, 111
      %v180 = vpop.permute.xlu0 %179
      %181 = vrot.lane.b32.xlu0 %v178, 111
      %v182 = vpop.permute.xlu0 %181
      %v183 = vrot.slane %v180, 4
      %v184 = vrot.slane %v182, 4
      %vm185 = vcmask 1043456
      %v186 = vsel %vm185, %v183, %v184
      %vm187 = vcmask 908288
      %v188 = vsel %vm187, %v180, %v186
      %v189 = vsel %vm187, %v182, %v184
      %192 = vst [vmem:[#allocation2] sm:$0x33] %v188
      %193 = vst [vmem:[#allocation2 + $0x8] sm:$0x3] %v189
      %v194 = vld [vmem:[%s138] sm:$0xff]
      %v196 = vcombine.low %v194, %v194
      %v198 = vunpack.c.l.s4 1983009808
      %v199 = vunpack.c.0.s8 %v198
      %v200 = vlaneseq
      %v201 = vshrl.u32 %v200, 7
      %v202 = vsub.s32 %v199, %v201
      %v203 = vrot.slane %v196, %v202
      %v205 = vunpack.c.l.s4 1983009808
      %v206 = vunpack.c.0.s8 %v205
      %v207 = vlaneseq
      %v208 = vshrl.u32 %v207, 7
      %v209 = vsub.s32 %v206, %v208
      %v210 = vrot.slane %v194, %v209
      %211 = vrot.lane.b32.xlu0 %v203, 110
      %v212 = vpop.permute.xlu0 %211
      %213 = vrot.lane.b32.xlu0 %v210, 110
      %v214 = vpop.permute.xlu0 %213
      %v215 = vrot.slane %v212, 4
      %v216 = vrot.slane %v214, 4
      %v217 = vsel %vm185, %v215, %v216
      %vm218 = vcmask 900096
      %v219 = vsel %vm218, %v212, %v217
      %v220 = vsel %vm218, %v214, %v216
      %223 = vst [vmem:[#allocation2] sm:$0xcc] %v219
      %224 = vst [vmem:[#allocation2 + $0x8] sm:$0xc] %v220
      %v225 = vld [vmem:[%s138] sm:$0xff]
      %v227 = vcombine.high %v225, %v225
      %v229 = vunpack.c.l.s4 1983009808
      %v230 = vunpack.c.0.s8 %v229
      %v231 = vlaneseq
      %v232 = vshrl.u32 %v231, 7
      %v233 = vsub.s32 %v230, %v232
      %v234 = vrot.slane %v225, %v233
      %v236 = vunpack.c.l.s4 1983009808
      %v237 = vunpack.c.0.s8 %v236
      %v238 = vlaneseq
      %v239 = vshrl.u32 %v238, 7
      %v240 = vsub.s32 %v237, %v239
      %v241 = vrot.slane %v227, %v240
      %242 = vrot.lane.b32.xlu0 %v234, 109
      %v243 = vpop.permute.xlu0 %242
      %244 = vrot.lane.b32.xlu0 %v241, 109
      %v245 = vpop.permute.xlu0 %244
      %v246 = vrot.slane %v243, 4
      %v247 = vrot.slane %v245, 4
      %v248 = vsel %vm185, %v246, %v247
      %vm249 = vcmask 891904
      %v250 = vsel %vm249, %v243, %v248
      %v251 = vsel %vm249, %v245, %v247
      %254 = vst [vmem:[#allocation2 + $0xc] sm:$0x33] %v250
      %255 = vst [vmem:[#allocation2 + $0x14] sm:$0x3] %v251
      %v256 = vld [vmem:[%s138] sm:$0xff]
      %v258 = vcombine.low %v256, %v256
      %v260 = vunpack.c.l.s4 1983009808
      %v261 = vunpack.c.0.s8 %v260
      %v262 = vlaneseq
      %v263 = vshrl.u32 %v262, 7
      %v264 = vsub.s32 %v261, %v263
      %v265 = vrot.slane %v258, %v264
      %v267 = vunpack.c.l.s4 1983009808
      %v268 = vunpack.c.0.s8 %v267
      %v269 = vlaneseq
      %v270 = vshrl.u32 %v269, 7
      %v271 = vsub.s32 %v268, %v270
      %v272 = vrot.slane %v256, %v271
      %273 = vrot.lane.b32.xlu0 %v265, 93
      %v274 = vpop.permute.xlu0 %273
      %275 = vrot.lane.b32.xlu0 %v272, 93
      %v276 = vpop.permute.xlu0 %275
      %v277 = vrot.slane %v274, 4
      %v278 = vrot.slane %v276, 4
      %v279 = vsel %vm185, %v277, %v278
      %vm280 = vcmask 760832
      %v281 = vsel %vm280, %v274, %v279
      %v282 = vsel %vm280, %v276, %v278
      %285 = vst [vmem:[#allocation2 + $0xc] sm:$0xcc] %v281
      %286 = vst [vmem:[#allocation2 + $0x14] sm:$0xc] %v282
      %v287 = vld [vmem:[%s138] sm:$0xff]
      %v289 = vcombine.high %v287, %v287
      %v291 = vunpack.c.l.s4 1983009808
      %v292 = vunpack.c.0.s8 %v291
      %v293 = vlaneseq
      %v294 = vshrl.u32 %v293, 7
      %v295 = vsub.s32 %v292, %v294
      %v296 = vrot.slane %v287, %v295
      %v298 = vunpack.c.l.s4 1983009808
      %v299 = vunpack.c.0.s8 %v298
      %v300 = vlaneseq
      %v301 = vshrl.u32 %v300, 7
      %v302 = vsub.s32 %v299, %v301
      %v303 = vrot.slane %v289, %v302
      %304 = vrot.lane.b32.xlu0 %v296, 92
      %v305 = vpop.permute.xlu0 %304
      %306 = vrot.lane.b32.xlu0 %v303, 92
      %v307 = vpop.permute.xlu0 %306
      %v308 = vrot.slane %v305, 4
      %v309 = vrot.slane %v307, 4
      %v310 = vsel %vm185, %v308, %v309
      %vm311 = vcmask 752640
      %v312 = vsel %vm311, %v305, %v310
      %v313 = vsel %vm311, %v307, %v309
      %316 = vst [vmem:[#allocation2 + $0x18] sm:$0x33] %v312
      %317 = vst [vmem:[#allocation2 + $0x20] sm:$0x3] %v313
      %v318 = vld [vmem:[%s138] sm:$0xff]
      %v320 = vcombine.low %v318, %v318
      %v322 = vunpack.c.l.s4 1983009808
      %v323 = vunpack.c.0.s8 %v322
      %v324 = vlaneseq
      %v325 = vshrl.u32 %v324, 7
      %v326 = vsub.s32 %v323, %v325
      %v327 = vrot.slane %v320, %v326
      %v329 = vunpack.c.l.s4 1983009808
      %v330 = vunpack.c.0.s8 %v329
      %v331 = vlaneseq
      %v332 = vshrl.u32 %v331, 7
      %v333 = vsub.s32 %v330, %v332
      %v334 = vrot.slane %v318, %v333
      %335 = vrot.lane.b32.xlu0 %v327, 91
      %v336 = vpop.permute.xlu0 %335
      %337 = vrot.lane.b32.xlu0 %v334, 91
      %v338 = vpop.permute.xlu0 %337
      %v339 = vrot.slane %v336, 4
      %v340 = vrot.slane %v338, 4
      %v341 = vsel %vm185, %v339, %v340
      %vm342 = vcmask 744448
      %v343 = vsel %vm342, %v336, %v341
      %v344 = vsel %vm342, %v338, %v340
      %347 = vst [vmem:[#allocation2 + $0x18] sm:$0xcc] %v343
      %348 = vst [vmem:[#allocation2 + $0x20] sm:$0xc] %v344
      %v349 = vld [vmem:[%s138] sm:$0xff]
      %v351 = vcombine.high %v349, %v349
      %v353 = vunpack.c.l.s4 1983009808
      %v354 = vunpack.c.0.s8 %v353
      %v355 = vlaneseq
      %v356 = vshrl.u32 %v355, 7
      %v357 = vsub.s32 %v354, %v356
      %v358 = vrot.slane %v349, %v357
      %v360 = vunpack.c.l.s4 1983009808
      %v361 = vunpack.c.0.s8 %v360
      %v362 = vlaneseq
      %v363 = vshrl.u32 %v362, 7
      %v364 = vsub.s32 %v361, %v363
      %v365 = vrot.slane %v351, %v364
      %366 = vrot.lane.b32.xlu0 %v358, 75
      %v367 = vpop.permute.xlu0 %366
      %368 = vrot.lane.b32.xlu0 %v365, 75
      %v369 = vpop.permute.xlu0 %368
      %v370 = vrot.slane %v367, 4
      %v371 = vrot.slane %v369, 4
      %v372 = vsel %vm185, %v370, %v371
      %vm373 = vcmask 613376
      %v374 = vsel %vm373, %v367, %v372
      %v375 = vsel %vm373, %v369, %v371
      %378 = vst [vmem:[#allocation2 + $0x24] sm:$0x33] %v374
      %379 = vst [vmem:[#allocation2 + $0x2c] sm:$0x3] %v375
      %v380 = vld [vmem:[%s138] sm:$0xff]
      %v382 = vcombine.low %v380, %v380
      %v384 = vunpack.c.l.s4 1983009808
      %v385 = vunpack.c.0.s8 %v384
      %v386 = vlaneseq
      %v387 = vshrl.u32 %v386, 7
      %v388 = vsub.s32 %v385, %v387
      %v389 = vrot.slane %v382, %v388
      %v391 = vunpack.c.l.s4 1983009808
      %v392 = vunpack.c.0.s8 %v391
      %v393 = vlaneseq
      %v394 = vshrl.u32 %v393, 7
      %v395 = vsub.s32 %v392, %v394
      %v396 = vrot.slane %v380, %v395
      %397 = vrot.lane.b32.xlu0 %v389, 74
      %v398 = vpop.permute.xlu0 %397
      %399 = vrot.lane.b32.xlu0 %v396, 74
      %v400 = vpop.permute.xlu0 %399
      %v401 = vrot.slane %v398, 4
      %v402 = vrot.slane %v400, 4
      %v403 = vsel %vm185, %v401, %v402
      %vm404 = vcmask 605184
      %v405 = vsel %vm404, %v398, %v403
      %v406 = vsel %vm404, %v400, %v402
      %409 = vst [vmem:[#allocation2 + $0x24] sm:$0xcc] %v405
      %410 = vst [vmem:[#allocation2 + $0x2c] sm:$0xc] %v406
      %v411 = vld [vmem:[%s138] sm:$0xff]
      %v413 = vcombine.high %v411, %v411
      %v415 = vunpack.c.l.s4 1983009808
      %v416 = vunpack.c.0.s8 %v415
      %v417 = vlaneseq
      %v418 = vshrl.u32 %v417, 7
      %v419 = vsub.s32 %v416, %v418
      %v420 = vrot.slane %v411, %v419
      %v422 = vunpack.c.l.s4 1983009808
      %v423 = vunpack.c.0.s8 %v422
      %v424 = vlaneseq
      %v425 = vshrl.u32 %v424, 7
      %v426 = vsub.s32 %v423, %v425
      %v427 = vrot.slane %v413, %v426
      %428 = vrot.lane.b32.xlu0 %v420, 73
      %v429 = vpop.permute.xlu0 %428
      %430 = vrot.lane.b32.xlu0 %v427, 73
      %v431 = vpop.permute.xlu0 %430
      %v432 = vrot.slane %v429, 4
      %v433 = vrot.slane %v431, 4
      %v434 = vsel %vm185, %v432, %v433
      %vm435 = vcmask 596992
      %v436 = vsel %vm435, %v429, %v434
      %v437 = vsel %vm435, %v431, %v433
      %440 = vst [vmem:[#allocation2 + $0x30] sm:$0x33] %v436
      %441 = vst [vmem:[#allocation2 + $0x38] sm:$0x3] %v437
      %v442 = vld [vmem:[%s1] sm:$0xf]
      %v443 = vld [vmem:[#allocation2] sm:$0xff]
      %v444 = vld [vmem:[#allocation2 + $0x8] sm:$0xf]
      %v445 = vld [vmem:[#allocation2 + $0xc] sm:$0xff]
      %v446 = vld [vmem:[#allocation2 + $0x14] sm:$0xf]
      %v447 = vld [vmem:[#allocation2 + $0x18] sm:$0xff]
      %v448 = vld [vmem:[#allocation2 + $0x20] sm:$0xf]
      %v449 = vld [vmem:[#allocation2 + $0x24] sm:$0xff]
      %v450 = vld [vmem:[#allocation2 + $0x2c] sm:$0xf]
      %v451 = vld [vmem:[#allocation2 + $0x30] sm:$0xff]
      %v452 = vld [vmem:[#allocation2 + $0x38] sm:$0xf]
      %v463 = vunpack.c.l.b16 %v443
      %v464 = vunpack.c.h.b16 %v443
      %v465 = vunpack.c.l.b16 %v444
      %v466 = vunpack.c.l.b16 %v445
      %v467 = vunpack.c.h.b16 %v445
      %v468 = vunpack.c.l.b16 %v446
      %v469 = vunpack.c.l.b16 %v447
      %v470 = vunpack.c.h.b16 %v447
      %v471 = vunpack.c.l.b16 %v448
      %v472 = vunpack.c.l.b16 %v449
      %v473 = vunpack.c.h.b16 %v449
      %v474 = vunpack.c.l.b16 %v450
      %v475 = vunpack.c.l.b16 %v451
      %v476 = vunpack.c.h.b16 %v451
      %v477 = vunpack.c.l.b16 %v452
      %v478 = vpack.c.b16 %v466, %v463
      %v479 = vpack.c.b16 %v467, %v464
      %v480 = vpack.c.b16 %v468, %v465
      %v481 = vpack.c.b16 %v472, %v469
      %v482 = vpack.c.b16 %v473, %v470
      %v483 = vpack.c.b16 %v474, %v471
      %v484 = vpack.c.b16 %v475, %v475
      %v485 = vpack.c.b16 %v476, %v476
      %v486 = vpack.c.b16 %v477, %v477
      %vm493 = vcmask 326656
      %v495 = vsel %vm493, %v442, 0
      %vm497 = vcmask 1043456
      %v499 = vsel %vm497, %v484, 0
      %v502 = vsel %vm497, %v485, 0
      %v505 = vsel %vm497, %v486, 0
      %507 = vmatprep.subr.bf16.mxu0 %v479
      %508 = vmatpush1.bf16.msra.mxu0 %v478
      %509 = vmatprep.subr.bf16.mxu0 %v482
      %510 = vmatpush1.bf16.msra.mxu0 %v481
      %511 = vmatprep.subr.bf16.mxu0 %v502
      %512 = vmatpush1.bf16.msra.mxu0 %v499
      %513 = vmatprep.subr.bf16.mxu0 0
      %514 = vmatpush1.bf16.msra.mxu0 0
      %515 = vmatprep.subr.bf16.mxu0 0
      %516 = vmatpush1.bf16.msra.mxu0 0
      %517 = vmatprep.subr.bf16.mxu0 0
      %518 = vmatpush1.bf16.msra.mxu0 0
      %519 = vmatprep.subr.bf16.mxu0 0
      %520 = vmatpush1.bf16.msra.mxu0 0
      %521 = vmatprep.subr.bf16.mxu0 0
      %522 = vmatpush1.bf16.msra.mxu0 0
      %523 = vmatprep.subr.bf16.mxu0 0
      %524 = vmatpush1.bf16.msra.mxu0 0
      %525 = vmatprep.subr.bf16.mxu0 0
      %526 = vmatpush1.bf16.msra.mxu0 0
      %527 = vmatprep.subr.bf16.mxu0 0
      %528 = vmatpush1.bf16.msra.mxu0 0
      %529 = vmatprep.subr.bf16.mxu0 0
      %530 = vmatpush1.bf16.msra.mxu0 0
      %531 = vmatprep.subr.bf16.mxu0 0
      %532 = vmatpush1.bf16.msra.mxu0 0
      %533 = vmatprep.subr.bf16.mxu0 0
      %534 = vmatpush1.bf16.msra.mxu0 0
      %535 = vmatprep.subr.bf16.mxu0 0
      %536 = vmatpush1.bf16.msra.mxu0 0
      %537 = vmatprep.subr.bf16.mxu0 0
      %538 = vmatpush1.bf16.msra.mxu0 0
      %539 = vmatprep.mubr.bf16.mxu0 0
      %540 = vmatmul.mubr.bf16.gmra.mrb[0].mxu0 %v495
      %v541 = vpop.f32.mrb[0].mxu0
      %v542 = vadd.f32 0.0, %v541
      %v543 = vpop.f32.mrb[0].mxu0
      %v544 = vadd.f32 0.0, %v543
      %v545 = vpop.f32.mrb[0].mxu0
      %v546 = vpop.f32.mrb[0].mxu0
      %547 = vdwg.mxu0
      %548 = vmatprep.subr.bf16.mxu0 0
      %549 = vmatpush1.bf16.msra.mxu0 %v480
      %550 = vmatprep.subr.bf16.mxu0 0
      %551 = vmatpush1.bf16.msra.mxu0 %v483
      %552 = vmatprep.subr.bf16.mxu0 0
      %553 = vmatpush1.bf16.msra.mxu0 %v505
      %554 = vmatprep.subr.bf16.mxu0 0
      %555 = vmatpush1.bf16.msra.mxu0 0
      %556 = vmatprep.subr.bf16.mxu0 0
      %557 = vmatpush1.bf16.msra.mxu0 0
      %558 = vmatprep.subr.bf16.mxu0 0
      %559 = vmatpush1.bf16.msra.mxu0 0
      %560 = vmatprep.subr.bf16.mxu0 0
      %561 = vmatpush1.bf16.msra.mxu0 0
      %562 = vmatprep.subr.bf16.mxu0 0
      %563 = vmatpush1.bf16.msra.mxu0 0
      %564 = vmatprep.subr.bf16.mxu0 0
      %565 = vmatpush1.bf16.msra.mxu0 0
      %566 = vmatprep.subr.bf16.mxu0 0
      %567 = vmatpush1.bf16.msra.mxu0 0
      %568 = vmatprep.subr.bf16.mxu0 0
      %569 = vmatpush1.bf16.msra.mxu0 0
      %570 = vmatprep.subr.bf16.mxu0 0
      %571 = vmatpush1.bf16.msra.mxu0 0
      %572 = vmatprep.subr.bf16.mxu0 0
      %573 = vmatpush1.bf16.msra.mxu0 0
      %574 = vmatprep.subr.bf16.mxu0 0
      %575 = vmatpush1.bf16.msra.mxu0 0
      %576 = vmatprep.subr.bf16.mxu0 0
      %577 = vmatpush1.bf16.msra.mxu0 0
      %578 = vmatprep.subr.bf16.mxu0 0
      %579 = vmatpush1.bf16.msra.mxu0 0
      %580 = vmatprep.mubr.bf16.mxu0 0
      %581 = vmatmul.mubr.bf16.gmra.mrb[0].mxu0 %v495
      %v582 = vpop.f32.mrb[0].mxu0
      %v583 = vadd.f32 0.0, %v582
      %v584 = vpop.f32.mrb[0].mxu0
      %v585 = vpop.f32.mrb[0].mxu0
      %v586 = vpop.f32.mrb[0].mxu0
      %587 = vdwg.mxu0
      %v588 = vmax.f32 %v542, 0.0
      %v589 = vmax.f32 %v544, 0.0
      %v590 = vmax.f32 %v583, 0.0
      %591 = vst [vmem:[%s143] sm:$0xff] %v588
      %592 = vst [vmem:[%s143 + $0x8] sm:$0xff] %v589
      %593 = vst [vmem:[%s143 + $0x10] sm:$0xff] %v590
      %p594 = scmp.lt.s32.totalorder %s13, 1
      %s595 = scalar_select %p594, %s13, 1
      %s596 = smul.addr %s595, 3
      %s597 = smul.addr %s596, 8
      %s598 = scalar_lea.vmem %s2, %s597
      // Predicated region
      $region29: #{a_call__.1} parent=27 // pred_check
        %p599 = pneg %p78
      $region30: #{a_call__.1} parent=27 // pred_check_branch
        %601 = sbr.rel (%p599) target = $region32
      $region31: #{a_call__.1} parent=27 // pred_region
        _
      $region32: #{a_call__.1} parent=27 // pred_fallthru
        _
    $region28: #{a_call__.1} parent=5 // pred_fallthru
      _
    %p602 = scmp.le.s32.totalorder 2, %s8
    // Predicated region
    $region33: #{a_call__.1} parent=5 // pred_check
      %p603 = pneg %p602
    $region34: #{a_call__.1} parent=5 // pred_check_branch
      %605 = sbr.rel (%p603) target = $region36
    $region35: #{a_call__.1} parent=5 // pred_region
      %s606 = ssub.s32 %s8, 2
      // Predicated region
      $region37: #{a_call__.1} parent=35 // pred_check
        %p607 = pneg %p84
      $region38: #{a_call__.1} parent=35 // pred_check_branch
        %609 = sbr.rel (%p607) target = $region40
      $region39: #{a_call__.1} parent=35 // pred_region
        %p610 = scmp.lt.s32.totalorder %s14, 1
        %s611 = scalar_select %p610, %s14, 1
        %s612 = smul.addr %s611, 3
        %s613 = smul.addr %s612, 8
        %s614 = scalar_lea.vmem %s2, %s613
      $region40: #{a_call__.1} parent=35 // pred_fallthru
        _
    $region36: #{a_call__.1} parent=5 // pred_fallthru
      _
  $region6: #{a_call__.1} parent=0 // loop_footer
    %s12 = sadd.s32 1, %s8
  $region7: #{a_call__.1} parent=0 // loop_footer_branch
    %7 = sbr.rel target = $region3
  $region8: #{a_call__.1} parent=0 // loop_exit
    _

</llo_original>
